<compile_context>
chip_gen: v7x
topology: tpu7x:2x2x1
jax: 0.10.0
libtpu: 0.0.40
codegen_flags: <defaults>
</compile_context>

<pallas_src>
import functools

import jax
import jax.numpy as jnp
from jax.experimental import pallas as pl
from jax.experimental.pallas import tpu as pltpu


def _gce_kernel(outputs_ref, targets_ref, psum_ref, *, q, total_b, block_b):
    # outputs_ref: (TB, C)  logits tile (native dtype; last block may be ragged)
    # targets_ref: (TB, 1)  int32 target class per row
    # psum_ref:    (1, 1, 1) f32 per-tile partial sum of the loss terms
    pid = pl.program_id(0)

    if outputs_ref.dtype == jnp.bfloat16:
        x = outputs_ref[...]                       # bf16-native VPU/EUP path
    else:
        x = outputs_ref[...].astype(jnp.float32)   # exact f32 path
    tgt = targets_ref[...]                         # (TB, 1) int32

    col = jax.lax.broadcasted_iota(jnp.int32, x.shape, 1)          # (TB, C)

    # Row statistics for a numerically-stable log-softmax at the target class.
    m = jnp.max(x, axis=1, keepdims=True)                          # (TB, 1)
    e = jnp.exp(x - m)                                             # (TB, C)
    denom = jnp.sum(e, axis=1, keepdims=True, dtype=jnp.float32)   # (TB, 1) f32
    tgt_logit = jnp.max(jnp.where(col == tgt, x, -jnp.inf),
                        axis=1, keepdims=True)                     # (TB, 1)

    # pred_y ** q  ==  exp(q * log_softmax(x)[target]),  all on the (TB,1) column.
    log_py = (tgt_logit.astype(jnp.float32) - m.astype(jnp.float32)
              - jnp.log(denom))                                    # (TB, 1) f32
    per_row = (1.0 - jnp.exp(q * log_py)) * (1.0 / q)              # (TB, 1) f32

    # Mask rows past the true batch size (ragged last block).  jnp.where also
    # discards any NaN/inf produced from garbage rows.
    row_ids = pid * block_b + jax.lax.broadcasted_iota(
        jnp.int32, per_row.shape, 0)
    per_row = jnp.where(row_ids < total_b, per_row, 0.0)

    # One cheap sublane reduce -> single scalar store per tile.
    psum_ref[0] = jnp.sum(per_row, axis=0, keepdims=True)          # (1, 1)


def _round_up(x, m):
    return ((x + m - 1) // m) * m


def _vmem_limit_bytes():
    """Generation-aware scoped-VMEM limit: ~half of physical VMEM (v5e/v6e:
    128 MiB -> 64 MiB, v7x: 64 MiB -> 32 MiB), conservative fallback."""
    try:
        phys = int(pltpu.get_tpu_info().vmem_capacity_bytes)
    except Exception:
        phys = 64 * 1024 * 1024
    return min(phys // 2, 64 * 1024 * 1024)


def _pick_block_b(batch, n_cls, in_itemsize, compute_itemsize, vmem_limit):
    """Batch-tile rows: sublane-pack aligned, fits double-buffered native input
    plus in-kernel temporaries (with lane padding to 128) in ~half the VMEM
    limit, and keeps >=2 tiles so both v7x TensorCores get work."""
    pack = max(8, 32 // in_itemsize)          # 8/f32, 16/bf16, 32/int8
    if batch <= pack:
        return batch                          # single block == full batch dim
    padded_c = _round_up(n_cls, 128)          # lane padding of the VMEM tile
    # 2x double-buffered native input + ~3 compute-dtype temporaries + one f32
    # accumulation cast, per padded element.
    bytes_per_row = padded_c * (2 * in_itemsize + 3 * compute_itemsize + 4)
    budget = vmem_limit // 2                  # headroom for outputs/overheads
    tb = (budget // bytes_per_row) // pack * pack
    tb = max(pack, min(tb, 4096))
    if batch >= 2 * pack:
        tb = min(tb, _round_up(pl.cdiv(batch, 2), pack))   # >=2 tiles (v7x 2 TC)
    tb = min(tb, _round_up(batch, pack))
    return tb


def gce_loss(ind, outputs, targets, *, q, class_num, block_b=None):
    """Functional equivalent of GCE_loss.forward. `ind` is unused (matches the
    PyTorch module). Returns the scalar loss."""
    del ind
    B, C = outputs.shape
    assert C == class_num

    in_itemsize = jnp.dtype(outputs.dtype).itemsize
    compute_itemsize = 2 if outputs.dtype == jnp.bfloat16 else 4
    vmem_limit = _vmem_limit_bytes()

    if block_b is None:
        block_b = _pick_block_b(B, C, in_itemsize, compute_itemsize, vmem_limit)
    assert block_b % 8 == 0 or block_b == B

    num_tiles = pl.cdiv(B, block_b)           # ragged last block, no padding
    tgt2d = targets.astype(jnp.int32).reshape(B, 1)

    kernel = functools.partial(_gce_kernel, q=float(q), total_b=B,
                               block_b=block_b)

    psums = pl.pallas_call(
        kernel,
        out_shape=jax.ShapeDtypeStruct((num_tiles, 1, 1), jnp.float32),
        grid=(num_tiles,),
        in_specs=[
            pl.BlockSpec((block_b, C), lambda i: (i, 0)),   # logits tile
            pl.BlockSpec((block_b, 1), lambda i: (i, 0)),   # target column
        ],
        out_specs=pl.BlockSpec((1, 1, 1), lambda i: (i, 0, 0)),
        compiler_params=pltpu.CompilerParams(
            dimension_semantics=("parallel",),
            vmem_limit_bytes=vmem_limit,
        ),
    )(outputs, tgt2d)

    # num_tiles-element reduction kept in the wrapper so the grid axis stays
    # "parallel"; padded/ragged rows were already zeroed in-kernel.
    return jnp.sum(psums) / B


def _reference(outputs, targets, q, class_num):
    one_hot = jax.nn.one_hot(targets, class_num, dtype=jnp.float32)
    pred = jax.nn.softmax(outputs.astype(jnp.float32), axis=1)
    pred_y = jnp.sum(one_hot * pred, axis=1)
    return jnp.mean((1.0 - pred_y ** q) / q)


if __name__ == "__main__":
    # Module hyper-params (deterministic, in-script)
    beta = 0.2          # the "q" exponent
    lamb = 0.0          # unused in forward (matches PyTorch)
    num = 100           # sample_num (unused in forward)
    cls = 12            # class_num
    B = 20              # batch size (not a multiple of 8 -> ragged last block)

    key = jax.random.PRNGKey(0)
    k_out, k_tgt, k_ind = jax.random.split(key, 3)

    outputs = jax.random.normal(k_out, (B, cls), dtype=jnp.float32)
    targets = jax.random.randint(k_tgt, (B,), 0, cls)
    ind = jax.random.randint(k_ind, (B,), 0, num)        # unused by forward

    ref_loss = _reference(outputs, targets, beta, cls)

    # 1) small explicit tile (block_b=8 -> grid of 3, ragged+masked last block)
    loss_tiled = gce_loss(ind, outputs, targets, q=beta, class_num=cls,
                          block_b=8)
    # 2) auto-picked tile (>=2 tiles, generation-aware sizing)
    loss_auto = gce_loss(ind, outputs, targets, q=beta, class_num=cls)
    jax.block_until_ready((loss_tiled, loss_auto))

    assert jnp.allclose(loss_tiled, ref_loss, atol=1e-5, rtol=1e-5), \
        (loss_tiled, ref_loss)
    assert jnp.allclose(loss_auto, ref_loss, atol=1e-5, rtol=1e-5), \
        (loss_auto, ref_loss)

    print("KERNEL_OK")
</pallas_src>

<mosaic_0001>
module attributes {stable_mosaic.version = 11 : i64} {
  func.func @_gce_kernel(%arg0: i32, %arg1: memref<8x12xf32, #tpu.memory_space<vmem>>, %arg2: memref<8x1xi32, #tpu.memory_space<vmem>>, %arg3: memref<1x1x1xf32, #tpu.memory_space<vmem>>) attributes {dimension_semantics = [#tpu.dimension_semantics<parallel>], iteration_bounds = array<i64: 3>, scalar_prefetch = 0 : i64, scratch_operands = 0 : i64, tpu.core_type = #tpu.core_type<tc>, window_params = [{transform_indices = @transform_0, window_bounds = array<i64: 8, 12>}, {transform_indices = @transform_1, window_bounds = array<i64: 8, 1>}, {transform_indices = @transform_2, window_bounds = array<i64: 1, 1, 1>}]} {
    %c0 = arith.constant 0 : index
    %c0_0 = arith.constant 0 : index
    %0 = vector.load %arg1[%c0, %c0_0] : memref<8x12xf32, #tpu.memory_space<vmem>>, vector<8x12xf32>
    %c0_1 = arith.constant 0 : index
    %c0_2 = arith.constant 0 : index
    %1 = vector.load %arg2[%c0_1, %c0_2] : memref<8x1xi32, #tpu.memory_space<vmem>>, vector<8x1xi32>
    %2 = tpu.iota {dimensions = array<i32: 1>} : vector<8x12xi32>
    %cst = arith.constant dense<0xFF800000> : vector<8xf32>
    %3 = vector.multi_reduction <maximumf>, %0, %cst [1] : vector<8x12xf32> to vector<8xf32>
    %4 = vector.shape_cast %3 : vector<8xf32> to vector<8x1xf32>
    %5 = vector.broadcast %4 : vector<8x1xf32> to vector<8x12xf32>
    %6 = arith.subf %0, %5 : vector<8x12xf32>
    %7 = math.exp %6 : vector<8x12xf32>
    %cst_3 = arith.constant dense<0.000000e+00> : vector<8xf32>
    %8 = vector.multi_reduction <add>, %7, %cst_3 [1] : vector<8x12xf32> to vector<8xf32>
    %9 = vector.shape_cast %8 : vector<8xf32> to vector<8x1xf32>
    %10 = vector.broadcast %1 : vector<8x1xi32> to vector<8x12xi32>
    %11 = arith.cmpi eq, %2, %10 : vector<8x12xi32>
    %cst_4 = arith.constant 0xFF800000 : f32
    %12 = vector.broadcast %cst_4 : f32 to vector<8x12xf32>
    %13 = arith.select %11, %0, %12 : vector<8x12xi1>, vector<8x12xf32>
    %cst_5 = arith.constant dense<0xFF800000> : vector<8xf32>
    %14 = vector.multi_reduction <maximumf>, %13, %cst_5 [1] : vector<8x12xf32> to vector<8xf32>
    %15 = vector.shape_cast %14 : vector<8xf32> to vector<8x1xf32>
    %16 = arith.subf %15, %4 : vector<8x1xf32>
    %17 = math.log %9 : vector<8x1xf32>
    %18 = arith.subf %16, %17 : vector<8x1xf32>
    %cst_6 = arith.constant 2.000000e-01 : f32
    %19 = vector.broadcast %cst_6 : f32 to vector<8x1xf32>
    %20 = arith.mulf %19, %18 : vector<8x1xf32>
    %21 = math.exp %20 : vector<8x1xf32>
    %cst_7 = arith.constant 1.000000e+00 : f32
    %22 = vector.broadcast %cst_7 : f32 to vector<8x1xf32>
    %23 = arith.subf %22, %21 : vector<8x1xf32>
    %cst_8 = arith.constant 5.000000e+00 : f32
    %24 = vector.broadcast %cst_8 : f32 to vector<8x1xf32>
    %25 = arith.mulf %23, %24 : vector<8x1xf32>
    %c8_i32 = arith.constant 8 : i32
    %26 = arith.muli %arg0, %c8_i32 : i32
    %27 = tpu.iota {dimensions = array<i32: 0>} : vector<8x1xi32>
    %28 = vector.broadcast %26 : i32 to vector<8x1xi32>
    %29 = arith.addi %28, %27 : vector<8x1xi32>
    %c20_i32 = arith.constant 20 : i32
    %30 = vector.broadcast %c20_i32 : i32 to vector<8x1xi32>
    %31 = arith.cmpi slt, %29, %30 : vector<8x1xi32>
    %cst_9 = arith.constant 0.000000e+00 : f32
    %32 = vector.broadcast %cst_9 : f32 to vector<8x1xf32>
    %33 = arith.select %31, %25, %32 : vector<8x1xi1>, vector<8x1xf32>
    %cst_10 = arith.constant dense<0.000000e+00> : vector<1xf32>
    %34 = vector.multi_reduction <add>, %33, %cst_10 [0] : vector<8x1xf32> to vector<1xf32>
    %35 = vector.shape_cast %34 : vector<1xf32> to vector<1x1xf32>
    %c0_11 = arith.constant 0 : index
    %c0_12 = arith.constant 0 : index
    %c0_13 = arith.constant 0 : index
    %36 = vector.load %arg3[%c0_11, %c0_12, %c0_13] : memref<1x1x1xf32, #tpu.memory_space<vmem>>, vector<1x1x1xf32>
    %37 = vector.shape_cast %36 : vector<1x1x1xf32> to vector<1x1xf32>
    %38 = vector.shape_cast %35 : vector<1x1xf32> to vector<1x1x1xf32>
    tpu.vector_store %arg3[%c0_11, %c0_12, %c0_13], %38 {strides = array<i32>} : memref<1x1x1xf32, #tpu.memory_space<vmem>>, vector<1x1x1xf32>,
    return
  }
  func.func @transform_0(%arg0: i32) -> (i32, i32) {
    %c0_i32 = arith.constant 0 : i32
    %c0_i32_0 = arith.constant 0 : i32
    return %arg0, %c0_i32 : i32, i32
  }
  func.func @transform_1(%arg0: i32) -> (i32, i32) {
    %c0_i32 = arith.constant 0 : i32
    %c0_i32_0 = arith.constant 0 : i32
    return %arg0, %c0_i32 : i32, i32
  }
  func.func @transform_2(%arg0: i32) -> (i32, i32, i32) {
    %c0_i32 = arith.constant 0 : i32
    %c0_i32_0 = arith.constant 0 : i32
    %c0_i32_1 = arith.constant 0 : i32
    return %arg0, %c0_i32, %c0_i32_0 : i32, i32, i32
  }
}

</mosaic_0001>

<llo_original>
// kernel: tpu_custom_call.1
$region0: #{tpu_custom_call.1}
  #allocation0 [shape = 'u32[]', space=smem, size = 0x4, offset = 0x4, fixed_abs, tag = 'smem constant byte address 0x4 - core index']
  #allocation1 [shape = 'u32[144,128]{1,0:T(1,128)}', space=vmem, size = 0x12000, scoped, tag = 'internal scratch']
  %s0 = inlined_call_operand.vmem [shape: f32[20,12], index: 0, kind: input, shape index: {}]
  %s1 = inlined_call_operand.vmem [shape: s32[20,1], index: 1, kind: input, shape index: {}]
  %s2 = inlined_call_operand.vmem [shape: f32[3,1,1], index: 2, kind: output, shape index: {}]
  %s3 = sld [smem:[#allocation0]]
  $region41: #{tpu_custom_call.1} parent=0
    _
  %s5 = ssub.s32 1, %s3
  %s6 = scalar_select 0, %s5, %s3
  loop: start=0, step=1, limit=5
  $region2: #{tpu_custom_call.1} parent=0 // loop_pre_header
    _
  $region3: #{tpu_custom_call.1} parent=0 // loop_header
    %s8 = sphi 0, %s12
    %p9 = scmp.ge.s32.totalorder %s8, 5
    %s18 = sphi 0, %s20
    %s21 = sphi 0, %s18
    %s22 = sphi 0, %s21
    %s38 = sphi 0, %s22
    %s44 = sphi 0, %s46
    %s47 = sphi 0, %s44
    %s48 = sphi 0, %s47
    %s64 = sphi 0, %s48
    %s70 = sphi 0, %s72
    %s73 = sphi 0, %s70
    %s74 = sphi 0, %s73
    %s90 = sphi 0, %s74
  $region4: #{tpu_custom_call.1} parent=0 // loop_header_branch
    %11 = sbr.rel (%p9) target = $region8
  $region5: #{tpu_custom_call.1} parent=0 // loop_body
    %s13 = ssub.s32 %s8, 1
    %s14 = ssub.s32 %s8, 2
    %s15 = sadd.s32 %s8, 1
    %s16 = ssub.s32 %s8, %s15
    %p17 = scmp.eq.s32.totalorder %s16, 0
    %s19 = sadd.s32 %s18, 1
    %s20 = scalar_select %p17, %s18, %s19
    %p23 = pneg %p17
    %p24 = scmp.eq.s32.totalorder %s8, 2
    %p25 = por %p23, %p24
    %p26 = scmp.ne.s32.totalorder %s18, %s21
    %p27 = scmp.eq.s32.totalorder %s8, 0
    %p28 = por %p26, %p27
    %p29 = scmp.ne.s32.totalorder %s18, %s21
    %p30 = scmp.eq.s32.totalorder %s13, 2
    %p31 = por %p29, %p30
    %p32 = scmp.ne.s32.totalorder %s21, %s22
    %p33 = scmp.eq.s32.totalorder %s13, 0
    %p34 = por %p32, %p33
    %p35 = scmp.ne.s32.totalorder %s21, %s22
    %p36 = scmp.eq.s32.totalorder %s14, 2
    %p37 = por %p35, %p36
    %p39 = scmp.ne.s32.totalorder %s22, %s38
    %p40 = scmp.eq.s32.totalorder %s14, 0
    %p41 = por %p39, %p40
    %s42 = ssub.s32 %s8, %s15
    %p43 = scmp.eq.s32.totalorder %s42, 0
    %s45 = sadd.s32 %s44, 1
    %s46 = scalar_select %p43, %s44, %s45
    %p49 = pneg %p43
    %p50 = scmp.eq.s32.totalorder %s8, 2
    %p51 = por %p49, %p50
    %p52 = scmp.ne.s32.totalorder %s44, %s47
    %p53 = scmp.eq.s32.totalorder %s8, 0
    %p54 = por %p52, %p53
    %p55 = scmp.ne.s32.totalorder %s44, %s47
    %p56 = scmp.eq.s32.totalorder %s13, 2
    %p57 = por %p55, %p56
    %p58 = scmp.ne.s32.totalorder %s47, %s48
    %p59 = scmp.eq.s32.totalorder %s13, 0
    %p60 = por %p58, %p59
    %p61 = scmp.ne.s32.totalorder %s47, %s48
    %p62 = scmp.eq.s32.totalorder %s14, 2
    %p63 = por %p61, %p62
    %p65 = scmp.ne.s32.totalorder %s48, %s64
    %p66 = scmp.eq.s32.totalorder %s14, 0
    %p67 = por %p65, %p66
    %s68 = ssub.s32 %s8, %s15
    %p69 = scmp.eq.s32.totalorder %s68, 0
    %s71 = sadd.s32 %s70, 1
    %s72 = scalar_select %p69, %s70, %s71
    %p75 = pneg %p69
    %p76 = scmp.eq.s32.totalorder %s8, 2
    %p77 = por %p75, %p76
    %p78 = scmp.ne.s32.totalorder %s70, %s73
    %p79 = scmp.eq.s32.totalorder %s8, 0
    %p80 = por %p78, %p79
    %p81 = scmp.ne.s32.totalorder %s70, %s73
    %p82 = scmp.eq.s32.totalorder %s13, 2
    %p83 = por %p81, %p82
    %p84 = scmp.ne.s32.totalorder %s73, %s74
    %p85 = scmp.eq.s32.totalorder %s13, 0
    %p86 = por %p84, %p85
    %p87 = scmp.ne.s32.totalorder %s73, %s74
    %p88 = scmp.eq.s32.totalorder %s14, 2
    %p89 = por %p87, %p88
    %p91 = scmp.ne.s32.totalorder %s74, %s90
    %p92 = scmp.eq.s32.totalorder %s14, 0
    %p93 = por %p91, %p92
    %p94 = scmp.le.s32.totalorder 1, %s8
    %p95 = scmp.lt.s32.totalorder %s8, 4
    %p96 = pnand %p94, %p95
    %p97 = pneg %p96
    // Predicated region
    $region9: #{tpu_custom_call.1} parent=5 // pred_check
      _
    $region10: #{tpu_custom_call.1} parent=5 // pred_check_branch
      %99 = sbr.rel (%p96) target = $region12
    $region11: #{tpu_custom_call.1} parent=5 // pred_region
      %s100 = ssub.s32 %s8, 1
    $region12: #{tpu_custom_call.1} parent=5 // pred_fallthru
      _
    %p101 = scmp.lt.s32.totalorder %s8, 3
    // Predicated region
    $region13: #{tpu_custom_call.1} parent=5 // pred_check
      %p102 = pneg %p101
    $region14: #{tpu_custom_call.1} parent=5 // pred_check_branch
      %104 = sbr.rel (%p102) target = $region16
    $region15: #{tpu_custom_call.1} parent=5 // pred_region
      // Predicated region
      $region17: #{tpu_custom_call.1} parent=15 // pred_check
        %p105 = pneg %p28
      $region18: #{tpu_custom_call.1} parent=15 // pred_check_branch
        %107 = sbr.rel (%p105) target = $region20
      $region19: #{tpu_custom_call.1} parent=15 // pred_region
        %p108 = scmp.lt.s32.totalorder %s8, 2
        %s109 = scalar_select %p108, %s8, 2
        %s110 = smul.addr %s109, 8
        %s111 = scalar_lea.vmem %s0, %s110
      $region20: #{tpu_custom_call.1} parent=15 // pred_fallthru
        _
      // Predicated region
      $region21: #{tpu_custom_call.1} parent=15 // pred_check
        %p112 = pneg %p54
      $region22: #{tpu_custom_call.1} parent=15 // pred_check_branch
        %114 = sbr.rel (%p112) target = $region24
      $region23: #{tpu_custom_call.1} parent=15 // pred_region
        %p115 = scmp.lt.s32.totalorder %s8, 2
        %s116 = scalar_select %p115, %s8, 2
        %s117 = smul.addr %s116, 8
        %s118 = scalar_lea.vmem %s1, %s117
      $region24: #{tpu_custom_call.1} parent=15 // pred_fallthru
        _
    $region16: #{tpu_custom_call.1} parent=5 // pred_fallthru
      _
    %p119 = scmp.le.s32.totalorder 1, %s8
    %p120 = scmp.lt.s32.totalorder %s8, 4
    %p121 = pnand %p119, %p120
    %p122 = pneg %p121
    // Predicated region
    $region25: #{tpu_custom_call.1} parent=5 // pred_check
      _
    $region26: #{tpu_custom_call.1} parent=5 // pred_check_branch
      %124 = sbr.rel (%p121) target = $region28
    $region27: #{tpu_custom_call.1} parent=5 // pred_region
      %s125 = ssub.s32 %s8, 1
      %p126 = scmp.lt.s32.totalorder %s13, 2
      %s127 = scalar_select %p126, %s13, 2
      %s128 = smul.addr %s127, 8
      %s129 = scalar_lea.vmem %s0, %s128
      %p130 = pneg %p34
      %p131 = pneg %p31
      %p132 = scmp.lt.s32.totalorder %s13, 2
      %s133 = scalar_select %p132, %s13, 2
      %s134 = smul.addr %s133, 8
      %s135 = scalar_lea.vmem %s1, %s134
      %p136 = pneg %p60
      %p137 = pneg %p57
      %p138 = pneg %p86
      %p139 = pneg %p83
      %p140 = scmp.lt.s32.totalorder %s13, 2
      %s141 = scalar_select %p140, %s13, 2
      %s142 = scalar_lea.vmem %s2, %s141
      %p143 = scmp.lt.s32.totalorder %s13, 2
      %s144 = scalar_select %p143, %s13, 2
      %s145 = smul.addr %s144, 8
      %s146 = scalar_lea.vmem %s0, %s145
      %p147 = scmp.lt.s32.totalorder %s13, 2
      %s148 = scalar_select %p147, %s13, 2
      %s149 = smul.addr %s148, 8
      %s150 = scalar_lea.vmem %s1, %s149
      %p151 = scmp.lt.s32.totalorder %s13, 2
      %s152 = scalar_select %p151, %s13, 2
      %s153 = scalar_lea.vmem %s2, %s152
      %v154 = vld [vmem:[%s146] sm:$0xff]
      %v155 = vld [vmem:[%s150] sm:$0xff]
      %v156 = vlaneseq
      %v157 = vand.u32 %v156, 127
      %vm158 = vcmask 97280
      %v159 = vsel %vm158, %v154, -inf
      %160 = vmax.xlane.f32.xlu0 %v159
      %v161 = vpop.xlane.xlu0 %160
      %v162 = vsub.f32 %v154, %v161
      %v163 = vmul.f32 %v162, 1.442695
      %v164 = vpow.pop %v163
      %v165 = vsel %vm158, %v164, 0.0
      %166 = vadd.xlane.f32.xlu0 %v165
      %v167 = vpop.xlane.xlu0 %166
      %168 = vset.pattern.permute.xlu0 0
      %169 = vperm.xlu0 %168, %v155
      %v170 = vpop.permute.xlu0 %169
      %vm171 = vcmp.eq.s32.totalorder %v157, %v170
      %v172 = vsel %vm171, %v154, -inf
      %v173 = vsel %vm158, %v172, -inf
      %174 = vmax.xlane.f32.xlu0 %v173
      %v175 = vpop.xlane.xlu0 %174
      %v176 = vsub.f32 %v175, %v161
      %v177 = vlog2.pop %v167
      %v178 = vmul.f32 %v177, 0.6931472
      %v179 = vsub.f32 %v176, %v178
      %v180 = vmul.f32 %v179, 0.2
      %v181 = vmul.f32 %v180, 1.442695
      %v182 = vpow.pop %v181
      %v183 = vsub.f32 1.0, %v182
      %v184 = vmul.f32 %v183, 5.0
      %s185 = smul.u32 %s13, 8
      %v186 = vlaneseq
      %v187 = vshrl.u32 %v186, 7
      %v188 = vstv %s185
      %v189 = vadd.s32 %v188, %v187
      %vm190 = vcmp.lt.s32.totalorder %v189, 20
      %v191 = vsel %vm190, %v184, 0.0
      %v192 = vrot.slane %v191, 4
      %v193 = vadd.f32 %v191, %v192
      %v194 = vrot.slane %v193, 2
      %v195 = vadd.f32 %v193, %v194
      %v196 = vrot.slane %v195, 1
      %v197 = vadd.f32 %v195, %v196
      %vm198 = vcmask 0
      %199 = vst.msk [vmem:[%s153] sm:$0x1] %vm198, %v197
      %p200 = scmp.lt.s32.totalorder %s13, 2
      %s201 = scalar_select %p200, %s13, 2
      %s202 = scalar_lea.vmem %s2, %s201
      // Predicated region
      $region29: #{tpu_custom_call.1} parent=27 // pred_check
        %p203 = pneg %p83
      $region30: #{tpu_custom_call.1} parent=27 // pred_check_branch
        %205 = sbr.rel (%p203) target = $region32
      $region31: #{tpu_custom_call.1} parent=27 // pred_region
        _
      $region32: #{tpu_custom_call.1} parent=27 // pred_fallthru
        _
    $region28: #{tpu_custom_call.1} parent=5 // pred_fallthru
      _
    %p206 = scmp.le.s32.totalorder 2, %s8
    // Predicated region
    $region33: #{tpu_custom_call.1} parent=5 // pred_check
      %p207 = pneg %p206
    $region34: #{tpu_custom_call.1} parent=5 // pred_check_branch
      %209 = sbr.rel (%p207) target = $region36
    $region35: #{tpu_custom_call.1} parent=5 // pred_region
      %s210 = ssub.s32 %s8, 2
      // Predicated region
      $region37: #{tpu_custom_call.1} parent=35 // pred_check
        %p211 = pneg %p89
      $region38: #{tpu_custom_call.1} parent=35 // pred_check_branch
        %213 = sbr.rel (%p211) target = $region40
      $region39: #{tpu_custom_call.1} parent=35 // pred_region
        %p214 = scmp.lt.s32.totalorder %s14, 2
        %s215 = scalar_select %p214, %s14, 2
        %s216 = scalar_lea.vmem %s2, %s215
      $region40: #{tpu_custom_call.1} parent=35 // pred_fallthru
        _
    $region36: #{tpu_custom_call.1} parent=5 // pred_fallthru
      _
  $region6: #{tpu_custom_call.1} parent=0 // loop_footer
    %s12 = sadd.s32 1, %s8
  $region7: #{tpu_custom_call.1} parent=0 // loop_footer_branch
    %7 = sbr.rel target = $region3
  $region8: #{tpu_custom_call.1} parent=0 // loop_exit
    _

</llo_original>
